<compile_context>
chip_gen: v7x
topology: tpu7x:2x2x1
jax: 0.10.0
libtpu: 0.0.40
codegen_flags: <defaults>
</compile_context>

<pallas_src>
import jax
import jax.numpy as jnp
from jax.experimental import pallas as pl
from jax.experimental.pallas import tpu as pltpu


def _round_up(n, m):
    return ((n + m - 1) // m) * m


def _decoder_kernel(xT_ref, w1_ref, b1_ref, w2_ref, b2_ref, w3_ref, b3_ref,
                    o_ref):
    # Batch lives on the lane axis: xT is (in_size, TILE_B).
    xT = xT_ref[...].astype(jnp.float32)

    # l1 + ReLU : (h1, in) @ (in, TILE_B) -> (h1, TILE_B)      (MXU)
    h1 = jnp.dot(w1_ref[...], xT, preferred_element_type=jnp.float32)
    h1 = jnp.maximum(h1 + b1_ref[...], 0.0)

    # l2 + ReLU : (E, h1) @ (h1, TILE_B) -> (E, TILE_B)        (MXU)
    h2 = jnp.dot(w2_ref[...], h1, preferred_element_type=jnp.float32)
    h2 = jnp.maximum(h2 + b2_ref[...], 0.0)

    # Fused  F.normalize(p=2, over features)  +  l3 (out_features = 1):
    #   (h2 / max(||h2||, eps)) . w3  ==  (h2 . w3) / max(||h2||, eps)
    # Both reductions are 16-row sublane reduces; results are lane-dense
    # (1, TILE_B) rows with the batch on the lane axis.
    w3_col = w3_ref[...]                                   # (E, 1)
    s = jnp.sum(h2 * w3_col, axis=0, keepdims=True)        # (1, TILE_B)
    n2 = jnp.sum(h2 * h2, axis=0, keepdims=True)           # (1, TILE_B)
    inv_norm = 1.0 / jnp.maximum(jnp.sqrt(n2), 1e-12)      # exact (tiny row)

    logits = s * inv_norm + b3_ref[0]                      # b3 scalar (SMEM)
    o_ref[...] = jax.nn.sigmoid(logits).astype(o_ref.dtype)


@jax.jit
def decoder_forward(x, w1, b1, w2, b2, w3, b3):
    """x: (B, in_size); weights in PyTorch [out, in] layout; biases (out,)."""
    B, in_size = x.shape
    h1_size = w1.shape[0]
    embed = w2.shape[0]

    # Batch tile on the lane axis: multiple of 128 lanes, large enough to
    # amortize the ~0.35 us per-grid-step overhead.
    TILE_B = min(2048, _round_up(B, 128))
    B_pad = _round_up(B, TILE_B)
    if B_pad != B:
        x = jnp.pad(x, ((0, B_pad - B), (0, 0)))
    xT = jnp.transpose(x.astype(jnp.float32))              # (in_size, B_pad)

    # Column-vector biases / layer-3 weight so they broadcast over lanes.
    b1_c = b1.reshape(h1_size, 1)
    b2_c = b2.reshape(embed, 1)
    w3_c = w3.reshape(embed, 1)
    b3_s = b3.reshape(1)

    grid = (B_pad // TILE_B,)

    out = pl.pallas_call(
        _decoder_kernel,
        out_shape=jax.ShapeDtypeStruct((1, B_pad), jnp.float32),
        grid=grid,
        in_specs=[
            pl.BlockSpec((in_size, TILE_B), lambda i: (0, i)),   # xT: tiled on lanes
            pl.BlockSpec((h1_size, in_size), lambda i: (0, 0)),  # w1: resident
            pl.BlockSpec((h1_size, 1), lambda i: (0, 0)),        # b1 (column)
            pl.BlockSpec((embed, h1_size), lambda i: (0, 0)),    # w2: resident
            pl.BlockSpec((embed, 1), lambda i: (0, 0)),          # b2 (column)
            pl.BlockSpec((embed, 1), lambda i: (0, 0)),          # w3 (column)
            pl.BlockSpec(memory_space=pltpu.MemorySpace.SMEM),   # b3 scalar
        ],
        out_specs=pl.BlockSpec((1, TILE_B), lambda i: (0, i)),   # lane-dense row
        compiler_params=pltpu.CompilerParams(
            dimension_semantics=("parallel",),
            vmem_limit_bytes=32 << 20,          # safe within v7x's 64 MiB VMEM
        ),
    )(xT, w1, b1_c, w2, b2_c, w3_c, b3_s)

    return out[0, :B].reshape(B, 1)


def init_params(key, input_size, embed_size):
    """Deterministic parameter init (PyTorch-style uniform fan_in bound).

    Weights are stored in PyTorch [out, in] layout; biases as (out,).
    """
    h1 = input_size // 2
    ks = jax.random.split(key, 6)

    def lin(kw, kb, fan_in, fan_out):
        bound = 1.0 / jnp.sqrt(fan_in)
        w = jax.random.uniform(kw, (fan_out, fan_in), jnp.float32,
                               minval=-bound, maxval=bound)
        b = jax.random.uniform(kb, (fan_out,), jnp.float32,
                               minval=-bound, maxval=bound)
        return w, b

    w1, b1 = lin(ks[0], ks[1], input_size, h1)
    w2, b2 = lin(ks[2], ks[3], h1, embed_size)
    w3, b3 = lin(ks[4], ks[5], embed_size, 1)
    return w1, b1, w2, b2, w3, b3


def reference_forward(x, w1, b1, w2, b2, w3, b3):
    """Pure-JAX reference mirroring the PyTorch forward."""
    h1 = jnp.maximum(x @ w1.T + b1, 0.0)
    h2 = jnp.maximum(h1 @ w2.T + b2, 0.0)
    norm = jnp.sqrt(jnp.sum(h2 * h2, axis=1, keepdims=True))
    h2n = h2 / jnp.maximum(norm, 1e-12)
    return jax.nn.sigmoid(h2n @ w3.T + b3)


if __name__ == "__main__":
    input_size = 32
    embed_size = 16

    key = jax.random.PRNGKey(0)
    kx, kp, kx2 = jax.random.split(key, 3)
    params = init_params(kp, input_size, embed_size)

    # Main test.
    batch = 8
    x = jax.random.normal(kx, (batch, input_size), jnp.float32)
    out = jax.block_until_ready(decoder_forward(x, *params))
    ref = reference_forward(x, *params)
    assert out.shape == (batch, 1), out.shape
    assert jnp.allclose(out, ref, atol=1e-5, rtol=1e-5), (out, ref)

    # Secondary test: ragged batch exercising the pad-and-slice path.
    batch2 = 20
    x2 = jax.random.normal(kx2, (batch2, input_size), jnp.float32)
    out2 = jax.block_until_ready(decoder_forward(x2, *params))
    ref2 = reference_forward(x2, *params)
    assert out2.shape == (batch2, 1), out2.shape
    assert jnp.allclose(out2, ref2, atol=1e-5, rtol=1e-5), (out2, ref2)

    print("KERNEL_OK")
</pallas_src>

<mosaic_0001>
module attributes {stable_mosaic.version = 11 : i64} {
  func.func @_decoder_kernel(%arg0: i32, %arg1: memref<32x128xf32, #tpu.memory_space<vmem>>, %arg2: memref<16x32xf32, #tpu.memory_space<vmem>>, %arg3: memref<16x1xf32, #tpu.memory_space<vmem>>, %arg4: memref<16x16xf32, #tpu.memory_space<vmem>>, %arg5: memref<16x1xf32, #tpu.memory_space<vmem>>, %arg6: memref<16x1xf32, #tpu.memory_space<vmem>>, %arg7: memref<1xf32, #tpu.memory_space<smem>>, %arg8: memref<1x128xf32, #tpu.memory_space<vmem>>) attributes {dimension_semantics = [#tpu.dimension_semantics<parallel>], iteration_bounds = array<i64: 1>, scalar_prefetch = 0 : i64, scratch_operands = 0 : i64, tpu.core_type = #tpu.core_type<tc>, window_params = [{transform_indices = @transform_0, window_bounds = array<i64: 32, 128>}, {pipeline_mode = #tpu.pipeline_mode<synchronous>, transform_indices = @transform_1, window_bounds = array<i64: 16, 32>}, {pipeline_mode = #tpu.pipeline_mode<synchronous>, transform_indices = @transform_2, window_bounds = array<i64: 16, 1>}, {pipeline_mode = #tpu.pipeline_mode<synchronous>, transform_indices = @transform_3, window_bounds = array<i64: 16, 16>}, {pipeline_mode = #tpu.pipeline_mode<synchronous>, transform_indices = @transform_4, window_bounds = array<i64: 16, 1>}, {pipeline_mode = #tpu.pipeline_mode<synchronous>, transform_indices = @transform_5, window_bounds = array<i64: 16, 1>}, {transform_indices = @transform_6, window_bounds = array<i64: 1>}, {transform_indices = @transform_7, window_bounds = array<i64: 1, 128>}]} {
    %c0 = arith.constant 0 : index
    %c0_0 = arith.constant 0 : index
    %0 = vector.load %arg1[%c0, %c0_0] : memref<32x128xf32, #tpu.memory_space<vmem>>, vector<32x128xf32>
    %c0_1 = arith.constant 0 : index
    %c0_2 = arith.constant 0 : index
    %1 = vector.load %arg2[%c0_1, %c0_2] : memref<16x32xf32, #tpu.memory_space<vmem>>, vector<16x32xf32>
    %cst = arith.constant dense<0.000000e+00> : vector<16x128xf32>
    %2 = tpu.matmul %1, %0, %cst {dimension_numbers = #tpu.dot_dimension_numbers<[1], [0], [0], [1], [0, 0, 1, 1], [], []>} : vector<16x32xf32>, vector<32x128xf32>, vector<16x128xf32> -> vector<16x128xf32>
    %c0_3 = arith.constant 0 : index
    %c0_4 = arith.constant 0 : index
    %3 = vector.load %arg3[%c0_3, %c0_4] : memref<16x1xf32, #tpu.memory_space<vmem>>, vector<16x1xf32>
    %4 = vector.broadcast %3 : vector<16x1xf32> to vector<16x128xf32>
    %5 = arith.addf %2, %4 : vector<16x128xf32>
    %cst_5 = arith.constant 0.000000e+00 : f32
    %6 = vector.broadcast %cst_5 : f32 to vector<16x128xf32>
    %7 = arith.maximumf %5, %6 : vector<16x128xf32>
    %c0_6 = arith.constant 0 : index
    %c0_7 = arith.constant 0 : index
    %8 = vector.load %arg4[%c0_6, %c0_7] : memref<16x16xf32, #tpu.memory_space<vmem>>, vector<16x16xf32>
    %cst_8 = arith.constant dense<0.000000e+00> : vector<16x128xf32>
    %9 = tpu.matmul %8, %7, %cst_8 {dimension_numbers = #tpu.dot_dimension_numbers<[1], [0], [0], [1], [0, 0, 1, 1], [], []>} : vector<16x16xf32>, vector<16x128xf32>, vector<16x128xf32> -> vector<16x128xf32>
    %c0_9 = arith.constant 0 : index
    %c0_10 = arith.constant 0 : index
    %10 = vector.load %arg5[%c0_9, %c0_10] : memref<16x1xf32, #tpu.memory_space<vmem>>, vector<16x1xf32>
    %11 = vector.broadcast %10 : vector<16x1xf32> to vector<16x128xf32>
    %12 = arith.addf %9, %11 : vector<16x128xf32>
    %cst_11 = arith.constant 0.000000e+00 : f32
    %13 = vector.broadcast %cst_11 : f32 to vector<16x128xf32>
    %14 = arith.maximumf %12, %13 : vector<16x128xf32>
    %c0_12 = arith.constant 0 : index
    %c0_13 = arith.constant 0 : index
    %15 = vector.load %arg6[%c0_12, %c0_13] : memref<16x1xf32, #tpu.memory_space<vmem>>, vector<16x1xf32>
    %16 = vector.broadcast %15 : vector<16x1xf32> to vector<16x128xf32>
    %17 = arith.mulf %14, %16 : vector<16x128xf32>
    %cst_14 = arith.constant dense<0.000000e+00> : vector<128xf32>
    %18 = vector.multi_reduction <add>, %17, %cst_14 [0] : vector<16x128xf32> to vector<128xf32>
    %19 = vector.shape_cast %18 : vector<128xf32> to vector<1x128xf32>
    %20 = arith.mulf %14, %14 : vector<16x128xf32>
    %cst_15 = arith.constant dense<0.000000e+00> : vector<128xf32>
    %21 = vector.multi_reduction <add>, %20, %cst_15 [0] : vector<16x128xf32> to vector<128xf32>
    %22 = vector.shape_cast %21 : vector<128xf32> to vector<1x128xf32>
    %23 = math.sqrt %22 : vector<1x128xf32>
    %cst_16 = arith.constant 9.99999996E-13 : f32
    %24 = vector.broadcast %cst_16 : f32 to vector<1x128xf32>
    %25 = arith.maximumf %23, %24 : vector<1x128xf32>
    %cst_17 = arith.constant 1.000000e+00 : f32
    %26 = vector.broadcast %cst_17 : f32 to vector<1x128xf32>
    %27 = arith.divf %26, %25 : vector<1x128xf32>
    %28 = arith.mulf %19, %27 : vector<1x128xf32>
    %c0_18 = arith.constant 0 : index
    %29 = memref.load %arg7[%c0_18] : memref<1xf32, #tpu.memory_space<smem>>
    %30 = vector.broadcast %29 : f32 to vector<1x128xf32>
    %31 = arith.addf %28, %30 : vector<1x128xf32>
    %32 = arith.negf %31 : vector<1x128xf32>
    %33 = math.exp %32 : vector<1x128xf32>
    %cst_19 = arith.constant 1.000000e+00 : f32
    %34 = vector.broadcast %cst_19 : f32 to vector<1x128xf32>
    %35 = arith.addf %34, %33 : vector<1x128xf32>
    %36 = arith.divf %34, %35 : vector<1x128xf32>
    %c0_20 = arith.constant 0 : index
    %c0_21 = arith.constant 0 : index
    %37 = vector.load %arg8[%c0_20, %c0_21] : memref<1x128xf32, #tpu.memory_space<vmem>>, vector<1x128xf32>
    tpu.vector_store %arg8[%c0_20, %c0_21], %36 {strides = array<i32>} : memref<1x128xf32, #tpu.memory_space<vmem>>, vector<1x128xf32>,
    return
  }
  func.func @transform_0(%arg0: i32) -> (i32, i32) {
    %c0_i32 = arith.constant 0 : i32
    %c0_i32_0 = arith.constant 0 : i32
    return %c0_i32, %arg0 : i32, i32
  }
  func.func @transform_1(%arg0: i32) -> (i32, i32) {
    %c0_i32 = arith.constant 0 : i32
    %c0_i32_0 = arith.constant 0 : i32
    %c0_i32_1 = arith.constant 0 : i32
    return %c0_i32, %c0_i32_0 : i32, i32
  }
  func.func @transform_2(%arg0: i32) -> (i32, i32) {
    %c0_i32 = arith.constant 0 : i32
    %c0_i32_0 = arith.constant 0 : i32
    %c0_i32_1 = arith.constant 0 : i32
    return %c0_i32, %c0_i32_0 : i32, i32
  }
  func.func @transform_3(%arg0: i32) -> (i32, i32) {
    %c0_i32 = arith.constant 0 : i32
    %c0_i32_0 = arith.constant 0 : i32
    %c0_i32_1 = arith.constant 0 : i32
    return %c0_i32, %c0_i32_0 : i32, i32
  }
  func.func @transform_4(%arg0: i32) -> (i32, i32) {
    %c0_i32 = arith.constant 0 : i32
    %c0_i32_0 = arith.constant 0 : i32
    %c0_i32_1 = arith.constant 0 : i32
    return %c0_i32, %c0_i32_0 : i32, i32
  }
  func.func @transform_5(%arg0: i32) -> (i32, i32) {
    %c0_i32 = arith.constant 0 : i32
    %c0_i32_0 = arith.constant 0 : i32
    %c0_i32_1 = arith.constant 0 : i32
    return %c0_i32, %c0_i32_0 : i32, i32
  }
  func.func @transform_6(%arg0: i32) -> i32 {
    %c0_i32 = arith.constant 0 : i32
    %c0_i32_0 = arith.constant 0 : i32
    return %c0_i32 : i32
  }
  func.func @transform_7(%arg0: i32) -> (i32, i32) {
    %c0_i32 = arith.constant 0 : i32
    %c0_i32_0 = arith.constant 0 : i32
    return %c0_i32, %arg0 : i32, i32
  }
}

</mosaic_0001>

<llo_original>
// kernel: decoder_forward.1
$region0: #{decoder_forward.1}
  #allocation0 [shape = 'u32[]', space=smem, size = 0x4, offset = 0x4, fixed_abs, tag = 'smem constant byte address 0x4 - core index']
  #allocation1 [shape = 'u32[144,128]{1,0:T(1,128)}', space=vmem, size = 0x12000, scoped, tag = 'internal scratch']
  #allocation2 [shape = 'f32[1]{0:T(128)S(6)}', space=smem, size = 0x200, scoped, tag = 'scoped memory for decoder_forward.1']
  %s0 = inlined_call_operand.vmem [shape: f32[32,128], index: 0, kind: input, shape index: {}]
  %s1 = inlined_call_operand.vmem [shape: f32[16,32], index: 1, kind: input, shape index: {}]
  %s2 = inlined_call_operand.vmem [shape: f32[16,1], index: 2, kind: input, shape index: {}]
  %s3 = inlined_call_operand.vmem [shape: f32[16,16], index: 3, kind: input, shape index: {}]
  %s4 = inlined_call_operand.vmem [shape: f32[16,1], index: 4, kind: input, shape index: {}]
  %s5 = inlined_call_operand.vmem [shape: f32[16,1], index: 5, kind: input, shape index: {}]
  %s6 = inlined_call_operand.<no memory space> [shape: f32[1], index: 6, kind: input, shape index: {}]
  %s7 = inlined_call_operand.vmem [shape: f32[1,128], index: 7, kind: output, shape index: {}]
  %s8 = sld [smem:[#allocation0]]
  $region38: #{decoder_forward.1} parent=0
    _
  %s10 = ssub.s32 1, %s8
  %s11 = scalar_select 0, %s10, %s8
  %12 = sst [smem:[#allocation2]] %s6
  // Predicated region
  $region2: #{decoder_forward.1} parent=0 // pred_check
    _
  $region3: #{decoder_forward.1} parent=0 // pred_check_branch
    %14 = sbr.rel (0) target = $region5
  $region4: #{decoder_forward.1} parent=0 // pred_region
    _
  $region5: #{decoder_forward.1} parent=0 // pred_fallthru
    _
  // Predicated region
  $region6: #{decoder_forward.1} parent=0 // pred_check
    _
  $region7: #{decoder_forward.1} parent=0 // pred_check_branch
    %16 = sbr.rel (0) target = $region9
  $region8: #{decoder_forward.1} parent=0 // pred_region
    _
  $region9: #{decoder_forward.1} parent=0 // pred_fallthru
    _
  // Predicated region
  $region10: #{decoder_forward.1} parent=0 // pred_check
    _
  $region11: #{decoder_forward.1} parent=0 // pred_check_branch
    %18 = sbr.rel (0) target = $region13
  $region12: #{decoder_forward.1} parent=0 // pred_region
    _
  $region13: #{decoder_forward.1} parent=0 // pred_fallthru
    _
  // Predicated region
  $region14: #{decoder_forward.1} parent=0 // pred_check
    _
  $region15: #{decoder_forward.1} parent=0 // pred_check_branch
    %20 = sbr.rel (0) target = $region17
  $region16: #{decoder_forward.1} parent=0 // pred_region
    _
  $region17: #{decoder_forward.1} parent=0 // pred_fallthru
    _
  // Predicated region
  $region18: #{decoder_forward.1} parent=0 // pred_check
    _
  $region19: #{decoder_forward.1} parent=0 // pred_check_branch
    %22 = sbr.rel (0) target = $region21
  $region20: #{decoder_forward.1} parent=0 // pred_region
    _
  $region21: #{decoder_forward.1} parent=0 // pred_fallthru
    _
  // Predicated region
  $region22: #{decoder_forward.1} parent=0 // pred_check
    _
  $region23: #{decoder_forward.1} parent=0 // pred_check_branch
    %24 = sbr.rel (0) target = $region25
  $region24: #{decoder_forward.1} parent=0 // pred_region
    _
  $region25: #{decoder_forward.1} parent=0 // pred_fallthru
    _
  // Predicated region
  $region26: #{decoder_forward.1} parent=0 // pred_check
    _
  $region27: #{decoder_forward.1} parent=0 // pred_check_branch
    %26 = sbr.rel (0) target = $region29
  $region28: #{decoder_forward.1} parent=0 // pred_region
    _
  $region29: #{decoder_forward.1} parent=0 // pred_fallthru
    _
  %v27 = vld [vmem:[%s0] sm:$0xff]
  %v28 = vld [vmem:[%s0 + $0x8] sm:$0xff]
  %v29 = vld [vmem:[%s0 + $0x10] sm:$0xff]
  %v30 = vld [vmem:[%s0 + $0x18] sm:$0xff]
  %v31 = vld [vmem:[%s1] sm:$0xff]
  %v32 = vld [vmem:[%s1 + $0x8] sm:$0xff]
  %v33 = vld [vmem:[%s2] sm:$0xff]
  %v34 = vld [vmem:[%s2 + $0x8] sm:$0xff]
  %36 = vset.pattern.permute.xlu0 0
  %37 = vperm.xlu0 %36, %v33
  %v38 = vpop.permute.xlu0 %37
  %41 = vset.pattern.permute.xlu0 0
  %42 = vperm.xlu0 %41, %v34
  %v43 = vpop.permute.xlu0 %42
  %vm45 = vcmask 261120
  %v47 = vsel %vm45, %v31, 0
  %v50 = vsel %vm45, %v32, 0
  %52 = vmatprep.subr.mxu0 0.0
  %53 = vmatpush1.msra.mxu0 %v27
  %54 = vmatprep.subr.mxu0 0.0
  %55 = vmatpush1.msra.mxu0 %v28
  %56 = vmatprep.subr.mxu0 0.0
  %57 = vmatpush1.msra.mxu0 %v29
  %58 = vmatprep.subr.mxu0 0.0
  %59 = vmatpush1.msra.mxu0 %v30
  %60 = vmatprep.subr.mxu0 0.0
  %61 = vmatpush1.msra.mxu0 0.0
  %62 = vmatprep.subr.mxu0 0.0
  %63 = vmatpush1.msra.mxu0 0.0
  %64 = vmatprep.subr.mxu0 0.0
  %65 = vmatpush1.msra.mxu0 0.0
  %66 = vmatprep.subr.mxu0 0.0
  %67 = vmatpush1.msra.mxu0 0.0
  %68 = vmatprep.subr.mxu0 0.0
  %69 = vmatpush1.msra.mxu0 0.0
  %70 = vmatprep.subr.mxu0 0.0
  %71 = vmatpush1.msra.mxu0 0.0
  %72 = vmatprep.subr.mxu0 0.0
  %73 = vmatpush1.msra.mxu0 0.0
  %74 = vmatprep.subr.mxu0 0.0
  %75 = vmatpush1.msra.mxu0 0.0
  %76 = vmatprep.subr.mxu0 0.0
  %77 = vmatpush1.msra.mxu0 0.0
  %78 = vmatprep.subr.mxu0 0.0
  %79 = vmatpush1.msra.mxu0 0.0
  %80 = vmatprep.subr.mxu0 0.0
  %81 = vmatpush1.msra.mxu0 0.0
  %82 = vmatprep.subr.mxu0 0.0
  %83 = vmatpush1.msra.mxu0 0.0
  %84 = vmatprep.subr.mxu0 0.0
  %85 = vmatpush1.msra.mxu0 0.0
  %86 = vmatprep.subr.mxu0 0.0
  %87 = vmatpush1.msra.mxu0 0.0
  %88 = vmatprep.subr.mxu0 0.0
  %89 = vmatpush1.msra.mxu0 0.0
  %90 = vmatprep.subr.mxu0 0.0
  %91 = vmatpush1.msra.mxu0 0.0
  %92 = vmatprep.subr.mxu0 0.0
  %93 = vmatpush1.msra.mxu0 0.0
  %94 = vmatprep.subr.mxu0 0.0
  %95 = vmatpush1.msra.mxu0 0.0
  %96 = vmatprep.subr.mxu0 0.0
  %97 = vmatpush1.msra.mxu0 0.0
  %98 = vmatprep.subr.mxu0 0.0
  %99 = vmatpush1.msra.mxu0 0.0
  %100 = vmatprep.subr.mxu0 0.0
  %101 = vmatpush1.msra.mxu0 0.0
  %102 = vmatprep.subr.mxu0 0.0
  %103 = vmatpush1.msra.mxu0 0.0
  %104 = vmatprep.subr.mxu0 0.0
  %105 = vmatpush1.msra.mxu0 0.0
  %106 = vmatprep.subr.mxu0 0.0
  %107 = vmatpush1.msra.mxu0 0.0
  %108 = vmatprep.subr.mxu0 0.0
  %109 = vmatpush1.msra.mxu0 0.0
  %110 = vmatprep.subr.mxu0 0.0
  %111 = vmatpush1.msra.mxu0 0.0
  %112 = vmatprep.subr.mxu0 0.0
  %113 = vmatpush1.msra.mxu0 0.0
  %114 = vmatprep.subr.mxu0 0.0
  %115 = vmatpush1.msra.mxu0 0.0
  %116 = vmatprep.mubr.f32.mxu0 0.0
  %117 = vmatmul.mubr.f32.gmra.mrb[0].mxu0 %v47
  %v118 = vpop.f32.mrb[0].mxu0
  %v119 = vadd.f32 %v38, %v118
  %v120 = vpop.f32.mrb[0].mxu0
  %121 = vmatprep.mubr.f32.mxu0 0.0
  %122 = vmatmul.mubr.f32.gmra.mrb[0].mxu0 %v50
  %v123 = vpop.f32.mrb[0].mxu0
  %v124 = vadd.f32 %v43, %v123
  %v125 = vpop.f32.mrb[0].mxu0
  %126 = vdwg.mxu0
  %v127 = vmax.f32 %v119, 0.0
  %v128 = vmax.f32 %v124, 0.0
  %v129 = vld [vmem:[%s3] sm:$0xff]
  %v130 = vld [vmem:[%s3 + $0x8] sm:$0xff]
  %v131 = vld [vmem:[%s4] sm:$0xff]
  %v132 = vld [vmem:[%s4 + $0x8] sm:$0xff]
  %134 = vset.pattern.permute.xlu0 0
  %135 = vperm.xlu0 %134, %v131
  %v136 = vpop.permute.xlu0 %135
  %139 = vset.pattern.permute.xlu0 0
  %140 = vperm.xlu0 %139, %v132
  %v141 = vpop.permute.xlu0 %140
  %vm143 = vcmask 130048
  %v145 = vsel %vm143, %v129, 0
  %v148 = vsel %vm143, %v130, 0
  %150 = vmatprep.subr.mxu0 0.0
  %151 = vmatpush1.msra.mxu0 %v127
  %152 = vmatprep.subr.mxu0 0.0
  %153 = vmatpush1.msra.mxu0 %v128
  %154 = vmatprep.subr.mxu0 0.0
  %155 = vmatpush1.msra.mxu0 0.0
  %156 = vmatprep.subr.mxu0 0.0
  %157 = vmatpush1.msra.mxu0 0.0
  %158 = vmatprep.subr.mxu0 0.0
  %159 = vmatpush1.msra.mxu0 0.0
  %160 = vmatprep.subr.mxu0 0.0
  %161 = vmatpush1.msra.mxu0 0.0
  %162 = vmatprep.subr.mxu0 0.0
  %163 = vmatpush1.msra.mxu0 0.0
  %164 = vmatprep.subr.mxu0 0.0
  %165 = vmatpush1.msra.mxu0 0.0
  %166 = vmatprep.subr.mxu0 0.0
  %167 = vmatpush1.msra.mxu0 0.0
  %168 = vmatprep.subr.mxu0 0.0
  %169 = vmatpush1.msra.mxu0 0.0
  %170 = vmatprep.subr.mxu0 0.0
  %171 = vmatpush1.msra.mxu0 0.0
  %172 = vmatprep.subr.mxu0 0.0
  %173 = vmatpush1.msra.mxu0 0.0
  %174 = vmatprep.subr.mxu0 0.0
  %175 = vmatpush1.msra.mxu0 0.0
  %176 = vmatprep.subr.mxu0 0.0
  %177 = vmatpush1.msra.mxu0 0.0
  %178 = vmatprep.subr.mxu0 0.0
  %179 = vmatpush1.msra.mxu0 0.0
  %180 = vmatprep.subr.mxu0 0.0
  %181 = vmatpush1.msra.mxu0 0.0
  %182 = vmatprep.subr.mxu0 0.0
  %183 = vmatpush1.msra.mxu0 0.0
  %184 = vmatprep.subr.mxu0 0.0
  %185 = vmatpush1.msra.mxu0 0.0
  %186 = vmatprep.subr.mxu0 0.0
  %187 = vmatpush1.msra.mxu0 0.0
  %188 = vmatprep.subr.mxu0 0.0
  %189 = vmatpush1.msra.mxu0 0.0
  %190 = vmatprep.subr.mxu0 0.0
  %191 = vmatpush1.msra.mxu0 0.0
  %192 = vmatprep.subr.mxu0 0.0
  %193 = vmatpush1.msra.mxu0 0.0
  %194 = vmatprep.subr.mxu0 0.0
  %195 = vmatpush1.msra.mxu0 0.0
  %196 = vmatprep.subr.mxu0 0.0
  %197 = vmatpush1.msra.mxu0 0.0
  %198 = vmatprep.subr.mxu0 0.0
  %199 = vmatpush1.msra.mxu0 0.0
  %200 = vmatprep.subr.mxu0 0.0
  %201 = vmatpush1.msra.mxu0 0.0
  %202 = vmatprep.subr.mxu0 0.0
  %203 = vmatpush1.msra.mxu0 0.0
  %204 = vmatprep.subr.mxu0 0.0
  %205 = vmatpush1.msra.mxu0 0.0
  %206 = vmatprep.subr.mxu0 0.0
  %207 = vmatpush1.msra.mxu0 0.0
  %208 = vmatprep.subr.mxu0 0.0
  %209 = vmatpush1.msra.mxu0 0.0
  %210 = vmatprep.subr.mxu0 0.0
  %211 = vmatpush1.msra.mxu0 0.0
  %212 = vmatprep.subr.mxu0 0.0
  %213 = vmatpush1.msra.mxu0 0.0
  %214 = vmatprep.mubr.f32.mxu0 0.0
  %215 = vmatmul.mubr.f32.gmra.mrb[0].mxu0 %v145
  %v216 = vpop.f32.mrb[0].mxu0
  %v217 = vadd.f32 %v136, %v216
  %v218 = vpop.f32.mrb[0].mxu0
  %219 = vmatprep.mubr.f32.mxu0 0.0
  %220 = vmatmul.mubr.f32.gmra.mrb[0].mxu0 %v148
  %v221 = vpop.f32.mrb[0].mxu0
  %v222 = vadd.f32 %v141, %v221
  %v223 = vpop.f32.mrb[0].mxu0
  %224 = vdwg.mxu0
  %v225 = vmax.f32 %v217, 0.0
  %v226 = vmax.f32 %v222, 0.0
  %v227 = vld [vmem:[%s5] sm:$0xff]
  %v228 = vld [vmem:[%s5 + $0x8] sm:$0xff]
  %230 = vset.pattern.permute.xlu0 0
  %231 = vperm.xlu0 %230, %v227
  %v232 = vpop.permute.xlu0 %231
  %235 = vset.pattern.permute.xlu0 0
  %236 = vperm.xlu0 %235, %v228
  %v237 = vpop.permute.xlu0 %236
  %v239 = vmul.f32 %v225, %v232
  %v240 = vmul.f32 %v226, %v237
  %v241 = vadd.f32 %v239, %v240
  %v242 = vrot.slane %v241, 4
  %v243 = vadd.f32 %v241, %v242
  %v244 = vrot.slane %v243, 2
  %v245 = vadd.f32 %v243, %v244
  %v246 = vrot.slane %v245, 1
  %v247 = vadd.f32 %v245, %v246
  %v248 = vmul.f32 %v225, %v225
  %v249 = vmul.f32 %v226, %v226
  %v250 = vadd.f32 %v248, %v249
  %v251 = vrot.slane %v250, 4
  %v252 = vadd.f32 %v250, %v251
  %v253 = vrot.slane %v252, 2
  %v254 = vadd.f32 %v252, %v253
  %v255 = vrot.slane %v254, 1
  %v256 = vadd.f32 %v254, %v255
  %v257 = vrsqrt.pop %v256
  %v258 = vmul.f32 %v256, %v257
  %vm259 = vcmp.eq.f32.partialorder %v256, inf
  %v260 = vsel %vm259, %v256, %v258
  %vm261 = vcmp.eq.f32.partialorder %v256, 0.0
  %v262 = vand.u32 %v256, 2147483648
  %v263 = vsel %vm261, %v262, %v260
  %v264 = vmax.f32 %v263, 1e-12
  %v265 = vrcp.pop %v264
  %v266 = vmul.f32 1.0, %v265
  %v267 = vmul.f32 %v247, %v266
  %s268 = sld [smem:[#allocation2]]
  %v269 = vstv %s268
  %v270 = vadd.f32 %v267, %v269
  %v271 = vxor.u32 %v270, 2147483648
  %v272 = vmul.f32 %v271, 1.442695
  %v273 = vpow.pop %v272
  %v274 = vadd.f32 %v273, 1.0
  %v275 = vrcp.pop %v274
  %v276 = vmul.f32 1.0, %v275
  %277 = vst [vmem:[%s7] sm:$0x1] %v276
  // Predicated region
  $region30: #{decoder_forward.1} parent=0 // pred_check
    _
  $region31: #{decoder_forward.1} parent=0 // pred_check_branch
    %279 = sbr.rel (0) target = $region33
  $region32: #{decoder_forward.1} parent=0 // pred_region
    _
  $region33: #{decoder_forward.1} parent=0 // pred_fallthru
    _
  // Predicated region
  $region34: #{decoder_forward.1} parent=0 // pred_check
    _
  $region35: #{decoder_forward.1} parent=0 // pred_check_branch
    %281 = sbr.rel (0) target = $region37
  $region36: #{decoder_forward.1} parent=0 // pred_region
    _
  $region37: #{decoder_forward.1} parent=0 // pred_fallthru
    _

</llo_original>
